<compile_context>
chip_gen: v7x
topology: tpu7x:2x2x1
jax: 0.10.0
libtpu: 0.0.40
codegen_flags: <defaults>
</compile_context>

<pallas_src>
import functools

import jax
import jax.numpy as jnp
from jax import lax
from jax.experimental import pallas as pl
from jax.experimental.pallas import tpu as pltpu


# y[m, n] = sum_k lhs[m, k] * rhs[n, k]   (no transpose / relayout needed)
_CONTRACT_LAST = (((1,), (1,)), ((), ()))

# Conservative scoped-VMEM request: well under v7x's 64 MiB physical VMEM and
# v5e/v6e's 128 MiB; our in-flight tiles are only a few MiB.
_VMEM_LIMIT_BYTES = 48 * 1024 * 1024


def _noisy_linear_train_kernel(x_ref, wmu_ref, wsig_ref, ein_ref, eout_ref,
                               bias_ref, o_ref, acc_ref):
    """One (tm, tn, tk) tile of the factorized noisy linear:

        y = x @ wmu^T + eps_out ⊙ ((x ⊙ eps_in) @ wsig^T) + bias
    """
    k = pl.program_id(2)

    @pl.when(k == 0)
    def _():
        acc_ref[...] = jnp.zeros_like(acc_ref)

    x = x_ref[...]                                            # (tm, tk)
    # eps_in combine is only (tm, tk)-sized; do it in f32 on the VPU.
    xn = (x.astype(jnp.float32) * ein_ref[...]).astype(x.dtype)

    mu_part = lax.dot_general(x, wmu_ref[...], _CONTRACT_LAST,
                              preferred_element_type=jnp.float32)
    sig_part = lax.dot_general(xn, wsig_ref[...], _CONTRACT_LAST,
                               preferred_element_type=jnp.float32)
    acc_ref[...] += mu_part + eout_ref[...] * sig_part        # (tm, tn) f32

    @pl.when(k == pl.num_programs(2) - 1)
    def _():
        o_ref[...] = (acc_ref[...] + bias_ref[...]).astype(o_ref.dtype)


def _noisy_linear_eval_kernel(x_ref, wmu_ref, bias_ref, o_ref, acc_ref):
    """Eval mode: y = x @ wmu^T + bias_mu."""
    k = pl.program_id(2)

    @pl.when(k == 0)
    def _():
        acc_ref[...] = jnp.zeros_like(acc_ref)

    acc_ref[...] += lax.dot_general(x_ref[...], wmu_ref[...], _CONTRACT_LAST,
                                    preferred_element_type=jnp.float32)

    @pl.when(k == pl.num_programs(2) - 1)
    def _():
        o_ref[...] = (acc_ref[...] + bias_ref[...]).astype(o_ref.dtype)


def _round_up(v, m):
    return ((v + m - 1) // m) * m


def _pick_tiles(B, K, N):
    tm = min(128, _round_up(B, 8))     # sublane-aligned batch tile
    tn = min(256, _round_up(N, 128))   # lane-dense, MXU-aligned output tile
    tk = min(512, _round_up(K, 128))   # MXU-aligned reduction tile
    return tm, tn, tk


@functools.partial(jax.jit, static_argnames=("training", "compute_dtype"))
def noisy_linear_forward(x, params, training=True, compute_dtype=jnp.float32):
    """Pallas implementation of NoisyLinear.forward.

    x: [B, in_features]; params as produced by init_noisy_linear.
    compute_dtype: dtype fed to the MXU (f32 or bf16); accumulation is f32.
    """
    orig_dtype = x.dtype
    B, K = x.shape
    N = params["weight_mu"].shape[0]

    tm, tn, tk = _pick_tiles(B, K, N)
    Mp, Kp, Np = _round_up(B, tm), _round_up(K, tk), _round_up(N, tn)
    grid = (Mp // tm, Np // tn, Kp // tk)

    # Pad once in the wrapper so every tile is (8,128)-aligned and the output
    # stays lane-dense; zero padding contributes nothing to the reduction.
    xp = jnp.pad(x, ((0, Mp - B), (0, Kp - K))).astype(compute_dtype)
    wmu = jnp.pad(params["weight_mu"],
                  ((0, Np - N), (0, Kp - K))).astype(compute_dtype)

    # Bias combine is O(N): hoist it out of the kernel entirely.
    if training:
        bias = params["bias_mu"] + params["bias_sigma"] * params["bias_epsilon"]
    else:
        bias = params["bias_mu"]
    bias = jnp.pad(bias, (0, Np - N)).reshape(1, Np).astype(jnp.float32)

    x_spec = pl.BlockSpec((tm, tk), lambda i, j, k: (i, k))
    w_spec = pl.BlockSpec((tn, tk), lambda i, j, k: (j, k))
    n_vec_spec = pl.BlockSpec((1, tn), lambda i, j, k: (0, j))
    k_vec_spec = pl.BlockSpec((1, tk), lambda i, j, k: (0, k))
    out_spec = pl.BlockSpec((tm, tn), lambda i, j, k: (i, j))

    compiler_params = pltpu.CompilerParams(
        dimension_semantics=("parallel", "parallel", "arbitrary"),
        vmem_limit_bytes=_VMEM_LIMIT_BYTES)

    out_shape = jax.ShapeDtypeStruct((Mp, Np), orig_dtype)
    scratch = [pltpu.VMEM((tm, tn), jnp.float32)]
    itm = jnp.dtype(compute_dtype).itemsize

    if training:
        wsig = jnp.pad(params["weight_sigma"],
                       ((0, Np - N), (0, Kp - K))).astype(compute_dtype)
        ein = jnp.pad(params["eps_in"],
                      (0, Kp - K)).reshape(1, Kp).astype(jnp.float32)
        eout = jnp.pad(params["eps_out"],
                       (0, Np - N)).reshape(1, Np).astype(jnp.float32)

        cost = pl.CostEstimate(
            flops=4 * Mp * Kp * Np,  # two matmuls
            transcendentals=0,
            bytes_accessed=itm * (Mp * Kp + 2 * Np * Kp)
            + 4 * (Mp * Np + Kp + 2 * Np))

        yp = pl.pallas_call(
            _noisy_linear_train_kernel,
            out_shape=out_shape,
            grid_spec=pltpu.PrefetchScalarGridSpec(
                num_scalar_prefetch=0,
                grid=grid,
                in_specs=[x_spec, w_spec, w_spec, k_vec_spec, n_vec_spec,
                          n_vec_spec],
                out_specs=out_spec,
                scratch_shapes=scratch),
            compiler_params=compiler_params,
            cost_estimate=cost,
        )(xp, wmu, wsig, ein, eout, bias)
    else:
        cost = pl.CostEstimate(
            flops=2 * Mp * Kp * Np,
            transcendentals=0,
            bytes_accessed=itm * (Mp * Kp + Np * Kp) + 4 * (Mp * Np + Np))

        yp = pl.pallas_call(
            _noisy_linear_eval_kernel,
            out_shape=out_shape,
            grid_spec=pltpu.PrefetchScalarGridSpec(
                num_scalar_prefetch=0,
                grid=grid,
                in_specs=[x_spec, w_spec, n_vec_spec],
                out_specs=out_spec,
                scratch_shapes=scratch),
            compiler_params=compiler_params,
            cost_estimate=cost,
        )(xp, wmu, bias)

    return yp[:B, :N]


# ----------------------------------------------------------------------------
# Deterministic parameter / noise construction (mirrors NoisyLinear.__init__,
# reset_parameters and reset_noise). Plain JAX glue — not part of the kernel.
# ----------------------------------------------------------------------------
def _scale_noise(key, size):
    """f(x) = sign(x) * sqrt(|x|)  (factorized Gaussian noise)."""
    x = jax.random.normal(key, (size,), dtype=jnp.float32)
    return jnp.sign(x) * jnp.sqrt(jnp.abs(x))


def init_noisy_linear(key, in_features, out_features, std_init=0.5):
    k_wmu, k_bmu, k_ein, k_eout = jax.random.split(key, 4)
    mu_range = 1.0 / jnp.sqrt(jnp.float32(in_features))

    weight_mu = jax.random.uniform(
        k_wmu, (out_features, in_features), jnp.float32, -mu_range, mu_range)
    bias_mu = jax.random.uniform(
        k_bmu, (out_features,), jnp.float32, -mu_range, mu_range)
    weight_sigma = jnp.full((out_features, in_features),
                            std_init / jnp.sqrt(jnp.float32(in_features)),
                            dtype=jnp.float32)
    bias_sigma = jnp.full((out_features,),
                          std_init / jnp.sqrt(jnp.float32(out_features)),
                          dtype=jnp.float32)

    # reset_noise(): factorized noise. The kernel consumes eps_in/eps_out
    # directly; weight_epsilon is kept only for the reference check.
    eps_in = _scale_noise(k_ein, in_features)
    eps_out = _scale_noise(k_eout, out_features)
    weight_epsilon = jnp.outer(eps_out, eps_in)
    bias_epsilon = eps_out

    return dict(weight_mu=weight_mu, weight_sigma=weight_sigma,
                bias_mu=bias_mu, bias_sigma=bias_sigma,
                eps_in=eps_in, eps_out=eps_out,
                weight_epsilon=weight_epsilon, bias_epsilon=bias_epsilon)


def _reference_forward(x, p, training=True):
    if training:
        w = p["weight_mu"] + p["weight_sigma"] * p["weight_epsilon"]
        b = p["bias_mu"] + p["bias_sigma"] * p["bias_epsilon"]
    else:
        w, b = p["weight_mu"], p["bias_mu"]
    return x @ w.T + b


if __name__ == "__main__":
    key = jax.random.PRNGKey(0)
    k_p1, k_x1, k_p2, k_x2 = jax.random.split(key, 4)

    # Small module-like shapes (exercises padding to lane/MXU alignment).
    B, K, N = 8, 32, 16
    params = init_noisy_linear(k_p1, K, N, std_init=0.5)
    x = jax.random.normal(k_x1, (B, K), dtype=jnp.float32)

    y_train = jax.block_until_ready(noisy_linear_forward(x, params, training=True))
    y_eval = jax.block_until_ready(noisy_linear_forward(x, params, training=False))
    ref_train = _reference_forward(x, params, training=True)
    ref_eval = _reference_forward(x, params, training=False)
    assert jnp.allclose(y_train, ref_train, atol=1e-4, rtol=1e-4)
    assert jnp.allclose(y_eval, ref_eval, atol=1e-4, rtol=1e-4)

    # Larger shapes exercising the full (i, j, k) grid: 2 N-tiles, 2 K-steps.
    B2, K2, N2 = 16, 1024, 512
    params2 = init_noisy_linear(k_p2, K2, N2, std_init=0.5)
    x2 = jax.random.normal(k_x2, (B2, K2), dtype=jnp.float32)

    y2 = jax.block_until_ready(noisy_linear_forward(x2, params2, training=True))
    ref2 = _reference_forward(x2, params2, training=True)
    assert jnp.allclose(y2, ref2, atol=1e-3, rtol=1e-3)

    # bf16 MXU feed with f32 accumulation (looser tolerance).
    y2_bf16 = jax.block_until_ready(
        noisy_linear_forward(x2, params2, training=True,
                             compute_dtype=jnp.bfloat16))
    assert jnp.allclose(y2_bf16, ref2, atol=5e-2, rtol=5e-2)

    print("KERNEL_OK")
</pallas_src>

<mosaic_0001>
module attributes {stable_mosaic.version = 11 : i64} {
  func.func @_noisy_linear_train_kernel(%arg0: i32, %arg1: i32, %arg2: i32, %arg3: memref<8x128xf32, #tpu.memory_space<vmem>>, %arg4: memref<128x128xf32, #tpu.memory_space<vmem>>, %arg5: memref<128x128xf32, #tpu.memory_space<vmem>>, %arg6: memref<1x128xf32, #tpu.memory_space<vmem>>, %arg7: memref<1x128xf32, #tpu.memory_space<vmem>>, %arg8: memref<1x128xf32, #tpu.memory_space<vmem>>, %arg9: memref<8x128xf32, #tpu.memory_space<vmem>>, %arg10: memref<8x128xf32, #tpu.memory_space<vmem>>) attributes {dimension_semantics = [#tpu.dimension_semantics<parallel>, #tpu.dimension_semantics<parallel>, #tpu.dimension_semantics<arbitrary>], iteration_bounds = array<i64: 1, 1, 1>, scalar_prefetch = 0 : i64, scratch_operands = 1 : i64, tpu.core_type = #tpu.core_type<tc>, window_params = [{transform_indices = @transform_0, window_bounds = array<i64: 8, 128>}, {transform_indices = @transform_1, window_bounds = array<i64: 128, 128>}, {transform_indices = @transform_2, window_bounds = array<i64: 128, 128>}, {transform_indices = @transform_3, window_bounds = array<i64: 1, 128>}, {transform_indices = @transform_4, window_bounds = array<i64: 1, 128>}, {transform_indices = @transform_5, window_bounds = array<i64: 1, 128>}, {transform_indices = @transform_6, window_bounds = array<i64: 8, 128>}]} {
    %c0_i32 = arith.constant 0 : i32
    %0 = arith.cmpi eq, %arg2, %c0_i32 : i32
    %1 = arith.extui %0 : i1 to i32
    %c0_i32_0 = arith.constant 0 : i32
    %2 = arith.cmpi ne, %1, %c0_i32_0 : i32
    scf.if %2 {
      %cst_17 = arith.constant 0.000000e+00 : f32
      %21 = vector.broadcast %cst_17 : f32 to vector<8x128xf32>
      %c0_18 = arith.constant 0 : index
      %c0_19 = arith.constant 0 : index
      %22 = vector.load %arg10[%c0_18, %c0_19] : memref<8x128xf32, #tpu.memory_space<vmem>>, vector<8x128xf32>
      tpu.vector_store %arg10[%c0_18, %c0_19], %21 {strides = array<i32>} : memref<8x128xf32, #tpu.memory_space<vmem>>, vector<8x128xf32>,
    } else {
    }
    %c0 = arith.constant 0 : index
    %c0_1 = arith.constant 0 : index
    %3 = vector.load %arg3[%c0, %c0_1] : memref<8x128xf32, #tpu.memory_space<vmem>>, vector<8x128xf32>
    %c0_2 = arith.constant 0 : index
    %c0_3 = arith.constant 0 : index
    %4 = vector.load %arg6[%c0_2, %c0_3] : memref<1x128xf32, #tpu.memory_space<vmem>>, vector<1x128xf32>
    %5 = vector.broadcast %4 : vector<1x128xf32> to vector<8x128xf32>
    %6 = arith.mulf %3, %5 : vector<8x128xf32>
    %c0_4 = arith.constant 0 : index
    %c0_5 = arith.constant 0 : index
    %7 = vector.load %arg4[%c0_4, %c0_5] : memref<128x128xf32, #tpu.memory_space<vmem>>, vector<128x128xf32>
    %cst = arith.constant dense<0.000000e+00> : vector<8x128xf32>
    %8 = tpu.matmul %3, %7, %cst {dimension_numbers = #tpu.dot_dimension_numbers<[1], [1], [0], [0], [0, 0, 1, 0], [], []>} : vector<8x128xf32>, vector<128x128xf32>, vector<8x128xf32> -> vector<8x128xf32>
    %c0_6 = arith.constant 0 : index
    %c0_7 = arith.constant 0 : index
    %9 = vector.load %arg5[%c0_6, %c0_7] : memref<128x128xf32, #tpu.memory_space<vmem>>, vector<128x128xf32>
    %cst_8 = arith.constant dense<0.000000e+00> : vector<8x128xf32>
    %10 = tpu.matmul %6, %9, %cst_8 {dimension_numbers = #tpu.dot_dimension_numbers<[1], [1], [0], [0], [0, 0, 1, 0], [], []>} : vector<8x128xf32>, vector<128x128xf32>, vector<8x128xf32> -> vector<8x128xf32>
    %c0_9 = arith.constant 0 : index
    %c0_10 = arith.constant 0 : index
    %11 = vector.load %arg10[%c0_9, %c0_10] : memref<8x128xf32, #tpu.memory_space<vmem>>, vector<8x128xf32>
    %c0_11 = arith.constant 0 : index
    %c0_12 = arith.constant 0 : index
    %12 = vector.load %arg7[%c0_11, %c0_12] : memref<1x128xf32, #tpu.memory_space<vmem>>, vector<1x128xf32>
    %13 = vector.broadcast %12 : vector<1x128xf32> to vector<8x128xf32>
    %14 = arith.mulf %13, %10 : vector<8x128xf32>
    %15 = arith.addf %8, %14 : vector<8x128xf32>
    %16 = arith.addf %11, %15 : vector<8x128xf32>
    %c0_13 = arith.constant 0 : index
    %c0_14 = arith.constant 0 : index
    %17 = vector.load %arg10[%c0_13, %c0_14] : memref<8x128xf32, #tpu.memory_space<vmem>>, vector<8x128xf32>
    tpu.vector_store %arg10[%c0_13, %c0_14], %16 {strides = array<i32>} : memref<8x128xf32, #tpu.memory_space<vmem>>, vector<8x128xf32>,
    %c0_i32_15 = arith.constant 0 : i32
    %18 = arith.cmpi eq, %arg2, %c0_i32_15 : i32
    %19 = arith.extui %18 : i1 to i32
    %c0_i32_16 = arith.constant 0 : i32
    %20 = arith.cmpi ne, %19, %c0_i32_16 : i32
    scf.if %20 {
      %c0_17 = arith.constant 0 : index
      %c0_18 = arith.constant 0 : index
      %21 = vector.load %arg10[%c0_17, %c0_18] : memref<8x128xf32, #tpu.memory_space<vmem>>, vector<8x128xf32>
      %c0_19 = arith.constant 0 : index
      %c0_20 = arith.constant 0 : index
      %22 = vector.load %arg8[%c0_19, %c0_20] : memref<1x128xf32, #tpu.memory_space<vmem>>, vector<1x128xf32>
      %23 = vector.broadcast %22 : vector<1x128xf32> to vector<8x128xf32>
      %24 = arith.addf %21, %23 : vector<8x128xf32>
      %c0_21 = arith.constant 0 : index
      %c0_22 = arith.constant 0 : index
      %25 = vector.load %arg9[%c0_21, %c0_22] : memref<8x128xf32, #tpu.memory_space<vmem>>, vector<8x128xf32>
      tpu.vector_store %arg9[%c0_21, %c0_22], %24 {strides = array<i32>} : memref<8x128xf32, #tpu.memory_space<vmem>>, vector<8x128xf32>,
    } else {
    }
    return
  }
  func.func @transform_0(%arg0: i32, %arg1: i32, %arg2: i32) -> (i32, i32) {
    %c0_i32 = arith.constant 0 : i32
    return %arg0, %arg2 : i32, i32
  }
  func.func @transform_1(%arg0: i32, %arg1: i32, %arg2: i32) -> (i32, i32) {
    %c0_i32 = arith.constant 0 : i32
    return %arg1, %arg2 : i32, i32
  }
  func.func @transform_2(%arg0: i32, %arg1: i32, %arg2: i32) -> (i32, i32) {
    %c0_i32 = arith.constant 0 : i32
    return %arg1, %arg2 : i32, i32
  }
  func.func @transform_3(%arg0: i32, %arg1: i32, %arg2: i32) -> (i32, i32) {
    %c0_i32 = arith.constant 0 : i32
    %c0_i32_0 = arith.constant 0 : i32
    return %c0_i32, %arg2 : i32, i32
  }
  func.func @transform_4(%arg0: i32, %arg1: i32, %arg2: i32) -> (i32, i32) {
    %c0_i32 = arith.constant 0 : i32
    %c0_i32_0 = arith.constant 0 : i32
    return %c0_i32, %arg1 : i32, i32
  }
  func.func @transform_5(%arg0: i32, %arg1: i32, %arg2: i32) -> (i32, i32) {
    %c0_i32 = arith.constant 0 : i32
    %c0_i32_0 = arith.constant 0 : i32
    return %c0_i32, %arg1 : i32, i32
  }
  func.func @transform_6(%arg0: i32, %arg1: i32, %arg2: i32) -> (i32, i32) {
    %c0_i32 = arith.constant 0 : i32
    return %arg0, %arg1 : i32, i32
  }
}

</mosaic_0001>

<llo_original>
// kernel: noisy_linear_forward.1
$region0: #{noisy_linear_forward.1}
  #allocation0 [shape = 'u32[]', space=smem, size = 0x4, offset = 0x4, fixed_abs, tag = 'smem constant byte address 0x4 - core index']
  #allocation1 [shape = 'u32[144,128]{1,0:T(1,128)}', space=vmem, size = 0x12000, scoped, tag = 'internal scratch']
  #allocation2 [shape = 'f32[8,128]{1,0:T(8,128)}', space=vmem, size = 0x1000, scoped, tag = 'scratch operand']
  %s0 = inlined_call_operand.vmem [shape: f32[8,128], index: 0, kind: input, shape index: {}]
  %s1 = inlined_call_operand.vmem [shape: f32[128,128], index: 1, kind: input, shape index: {}]
  %s2 = inlined_call_operand.vmem [shape: f32[128,128], index: 2, kind: input, shape index: {}]
  %s3 = inlined_call_operand.vmem [shape: f32[1,128], index: 3, kind: input, shape index: {}]
  %s4 = inlined_call_operand.vmem [shape: f32[1,128], index: 4, kind: input, shape index: {}]
  %s5 = inlined_call_operand.vmem [shape: f32[1,128], index: 5, kind: input, shape index: {}]
  %s6 = inlined_call_operand.hbm [shape: f32[8,128], index: 6, kind: output, shape index: {}]
  %s7 = sld [smem:[#allocation0]]
  $region42: #{noisy_linear_forward.1} parent=0
    _
  %s9 = ssub.s32 1, %s7
  %s10 = scalar_select 0, %s9, %s7
  $region1: #{noisy_linear_forward.1} parent=0
    #allocation3 [shape = 'u8[4096]{0}', space=vmem, size = 0x1000, scoped, tag = 'output window, operand 0, single buffered']
    #allocation4 [shape = 's32[1]{0}', space=sflag, size = 0x4, scoped, tag = 'scoped memory for noisy_linear_forward.1']
    %11 = vsyncpa [#allocation4], 0
    // Predicated region
    $region2: #{noisy_linear_forward.1} parent=1 // pred_check
      _
    $region3: #{noisy_linear_forward.1} parent=1 // pred_check_branch
      %13 = sbr.rel (0) target = $region5
    $region4: #{noisy_linear_forward.1} parent=1 // pred_region
      _
    $region5: #{noisy_linear_forward.1} parent=1 // pred_fallthru
      _
    // Predicated region
    $region6: #{noisy_linear_forward.1} parent=1 // pred_check
      _
    $region7: #{noisy_linear_forward.1} parent=1 // pred_check_branch
      %15 = sbr.rel (0) target = $region9
    $region8: #{noisy_linear_forward.1} parent=1 // pred_region
      _
    $region9: #{noisy_linear_forward.1} parent=1 // pred_fallthru
      _
    // Predicated region
    $region10: #{noisy_linear_forward.1} parent=1 // pred_check
      _
    $region11: #{noisy_linear_forward.1} parent=1 // pred_check_branch
      %17 = sbr.rel (0) target = $region13
    $region12: #{noisy_linear_forward.1} parent=1 // pred_region
      _
    $region13: #{noisy_linear_forward.1} parent=1 // pred_fallthru
      _
    // Predicated region
    $region14: #{noisy_linear_forward.1} parent=1 // pred_check
      _
    $region15: #{noisy_linear_forward.1} parent=1 // pred_check_branch
      %19 = sbr.rel (0) target = $region17
    $region16: #{noisy_linear_forward.1} parent=1 // pred_region
      _
    $region17: #{noisy_linear_forward.1} parent=1 // pred_fallthru
      _
    // Predicated region
    $region18: #{noisy_linear_forward.1} parent=1 // pred_check
      _
    $region19: #{noisy_linear_forward.1} parent=1 // pred_check_branch
      %21 = sbr.rel (0) target = $region21
    $region20: #{noisy_linear_forward.1} parent=1 // pred_region
      _
    $region21: #{noisy_linear_forward.1} parent=1 // pred_fallthru
      _
    // Predicated region
    $region22: #{noisy_linear_forward.1} parent=1 // pred_check
      _
    $region23: #{noisy_linear_forward.1} parent=1 // pred_check_branch
      %23 = sbr.rel (0) target = $region25
    $region24: #{noisy_linear_forward.1} parent=1 // pred_region
      _
    $region25: #{noisy_linear_forward.1} parent=1 // pred_fallthru
      _
    %p24 = scmp.eq.s32.totalorder 0, 0
    // Predicated region
    $region26: #{noisy_linear_forward.1} parent=1 // pred_check
      %p25 = pneg %p24
    $region27: #{noisy_linear_forward.1} parent=1 // pred_check_branch
      %27 = sbr.rel (%p25) target = $region29
    $region28: #{noisy_linear_forward.1} parent=1 // pred_region
      %28 = vst [vmem:[#allocation2] sm:$0xff] 0.0
    $region29: #{noisy_linear_forward.1} parent=1 // pred_fallthru
      _
    %v29 = vld [vmem:[%s0] sm:$0xff]
    %v30 = vld [vmem:[%s3] sm:$0x1]
    %v32 = vlaneseq
    %v33 = vshrl.u32 %v32, 7
    %v34 = vsub.s32 0, %v33
    %v35 = vrot.slane %v30, %v34
    %v37 = vmul.f32 %v29, %v35
    %v38 = vld [vmem:[%s1] sm:$0xff]
    %v39 = vld [vmem:[%s1 + $0x8] sm:$0xff]
    %v40 = vld [vmem:[%s1 + $0x10] sm:$0xff]
    %v41 = vld [vmem:[%s1 + $0x18] sm:$0xff]
    %v42 = vld [vmem:[%s1 + $0x20] sm:$0xff]
    %v43 = vld [vmem:[%s1 + $0x28] sm:$0xff]
    %v44 = vld [vmem:[%s1 + $0x30] sm:$0xff]
    %v45 = vld [vmem:[%s1 + $0x38] sm:$0xff]
    %v46 = vld [vmem:[%s1 + $0x40] sm:$0xff]
    %v47 = vld [vmem:[%s1 + $0x48] sm:$0xff]
    %v48 = vld [vmem:[%s1 + $0x50] sm:$0xff]
    %v49 = vld [vmem:[%s1 + $0x58] sm:$0xff]
    %v50 = vld [vmem:[%s1 + $0x60] sm:$0xff]
    %v51 = vld [vmem:[%s1 + $0x68] sm:$0xff]
    %v52 = vld [vmem:[%s1 + $0x70] sm:$0xff]
    %v53 = vld [vmem:[%s1 + $0x78] sm:$0xff]
    %v54 = vld [vmem:[%s2] sm:$0xff]
    %v55 = vld [vmem:[%s2 + $0x8] sm:$0xff]
    %v56 = vld [vmem:[%s2 + $0x10] sm:$0xff]
    %v57 = vld [vmem:[%s2 + $0x18] sm:$0xff]
    %v58 = vld [vmem:[%s2 + $0x20] sm:$0xff]
    %v59 = vld [vmem:[%s2 + $0x28] sm:$0xff]
    %v60 = vld [vmem:[%s2 + $0x30] sm:$0xff]
    %v61 = vld [vmem:[%s2 + $0x38] sm:$0xff]
    %v62 = vld [vmem:[%s2 + $0x40] sm:$0xff]
    %v63 = vld [vmem:[%s2 + $0x48] sm:$0xff]
    %v64 = vld [vmem:[%s2 + $0x50] sm:$0xff]
    %v65 = vld [vmem:[%s2 + $0x58] sm:$0xff]
    %v66 = vld [vmem:[%s2 + $0x60] sm:$0xff]
    %v67 = vld [vmem:[%s2 + $0x68] sm:$0xff]
    %v68 = vld [vmem:[%s2 + $0x70] sm:$0xff]
    %v69 = vld [vmem:[%s2 + $0x78] sm:$0xff]
    %70 = vmatprep.subr.mxu0 0.0
    %71 = vmatpush1.xpose.msra.mxu0 %v54
    %72 = vmatprep.subr.mxu0 0.0
    %73 = vmatpush1.xpose.msra.mxu0 %v55
    %74 = vmatprep.subr.mxu0 0.0
    %75 = vmatpush1.xpose.msra.mxu0 %v56
    %76 = vmatprep.subr.mxu0 0.0
    %77 = vmatpush1.xpose.msra.mxu0 %v57
    %78 = vmatprep.subr.mxu0 0.0
    %79 = vmatpush1.xpose.msra.mxu0 %v58
    %80 = vmatprep.subr.mxu0 0.0
    %81 = vmatpush1.xpose.msra.mxu0 %v59
    %82 = vmatprep.subr.mxu0 0.0
    %83 = vmatpush1.xpose.msra.mxu0 %v60
    %84 = vmatprep.subr.mxu0 0.0
    %85 = vmatpush1.xpose.msra.mxu0 %v61
    %86 = vmatprep.subr.mxu0 0.0
    %87 = vmatpush1.xpose.msra.mxu0 %v62
    %88 = vmatprep.subr.mxu0 0.0
    %89 = vmatpush1.xpose.msra.mxu0 %v63
    %90 = vmatprep.subr.mxu0 0.0
    %91 = vmatpush1.xpose.msra.mxu0 %v64
    %92 = vmatprep.subr.mxu0 0.0
    %93 = vmatpush1.xpose.msra.mxu0 %v65
    %94 = vmatprep.subr.mxu0 0.0
    %95 = vmatpush1.xpose.msra.mxu0 %v66
    %96 = vmatprep.subr.mxu0 0.0
    %97 = vmatpush1.xpose.msra.mxu0 %v67
    %98 = vmatprep.subr.mxu0 0.0
    %99 = vmatpush1.xpose.msra.mxu0 %v68
    %100 = vmatprep.subr.mxu0 0.0
    %101 = vmatpush1.xpose.msra.mxu0 %v69
    %102 = vmatprep.subr.mxu0 0.0
    %103 = vmatpush1.xpose.msra.mxu0 0.0
    %104 = vmatprep.subr.mxu0 0.0
    %105 = vmatpush1.xpose.msra.mxu0 0.0
    %106 = vmatprep.subr.mxu0 0.0
    %107 = vmatpush1.xpose.msra.mxu0 0.0
    %108 = vmatprep.subr.mxu0 0.0
    %109 = vmatpush1.xpose.msra.mxu0 0.0
    %110 = vmatprep.subr.mxu0 0.0
    %111 = vmatpush1.xpose.msra.mxu0 0.0
    %112 = vmatprep.subr.mxu0 0.0
    %113 = vmatpush1.xpose.msra.mxu0 0.0
    %114 = vmatprep.subr.mxu0 0.0
    %115 = vmatpush1.xpose.msra.mxu0 0.0
    %116 = vmatprep.subr.mxu0 0.0
    %117 = vmatpush1.xpose.msra.mxu0 0.0
    %118 = vmatprep.subr.mxu0 0.0
    %119 = vmatpush1.xpose.msra.mxu0 0.0
    %120 = vmatprep.subr.mxu0 0.0
    %121 = vmatpush1.xpose.msra.mxu0 0.0
    %122 = vmatprep.subr.mxu0 0.0
    %123 = vmatpush1.xpose.msra.mxu0 0.0
    %124 = vmatprep.subr.mxu0 0.0
    %125 = vmatpush1.xpose.msra.mxu0 0.0
    %126 = vmatprep.subr.mxu0 0.0
    %127 = vmatpush1.xpose.msra.mxu0 0.0
    %128 = vmatprep.subr.mxu0 0.0
    %129 = vmatpush1.xpose.msra.mxu0 0.0
    %130 = vmatprep.subr.mxu0 0.0
    %131 = vmatpush1.xpose.msra.mxu0 0.0
    %132 = vmatprep.subr.mxu0 0.0
    %133 = vmatpush1.xpose.msra.mxu0 0.0
    %134 = vmatprep.mubr.f32.mxu0 0.0
    %135 = vmatmul.mubr.f32.gmra.mrb[0].mxu0 %v37
    %v136 = vpop.f32.mrb[0].mxu0
    %v137 = vadd.f32 0.0, %v136
    %v138 = vpop.f32.mrb[0].mxu0
    %139 = vdwg.mxu0
    %v140 = vld [vmem:[#allocation2] sm:$0xff]
    %v141 = vld [vmem:[%s4] sm:$0x1]
    %v143 = vlaneseq
    %v144 = vshrl.u32 %v143, 7
    %v145 = vsub.s32 0, %v144
    %v146 = vrot.slane %v141, %v145
    %v148 = vmul.f32 %v146, %v137
    %149 = vmatprep.subr.mxu0 0.0
    %150 = vmatpush1.xpose.msra.mxu0 %v38
    %151 = vmatprep.subr.mxu0 0.0
    %152 = vmatpush1.xpose.msra.mxu0 %v39
    %153 = vmatprep.subr.mxu0 0.0
    %154 = vmatpush1.xpose.msra.mxu0 %v40
    %155 = vmatprep.subr.mxu0 0.0
    %156 = vmatpush1.xpose.msra.mxu0 %v41
    %157 = vmatprep.subr.mxu0 0.0
    %158 = vmatpush1.xpose.msra.mxu0 %v42
    %159 = vmatprep.subr.mxu0 0.0
    %160 = vmatpush1.xpose.msra.mxu0 %v43
    %161 = vmatprep.subr.mxu0 0.0
    %162 = vmatpush1.xpose.msra.mxu0 %v44
    %163 = vmatprep.subr.mxu0 0.0
    %164 = vmatpush1.xpose.msra.mxu0 %v45
    %165 = vmatprep.subr.mxu0 0.0
    %166 = vmatpush1.xpose.msra.mxu0 %v46
    %167 = vmatprep.subr.mxu0 0.0
    %168 = vmatpush1.xpose.msra.mxu0 %v47
    %169 = vmatprep.subr.mxu0 0.0
    %170 = vmatpush1.xpose.msra.mxu0 %v48
    %171 = vmatprep.subr.mxu0 0.0
    %172 = vmatpush1.xpose.msra.mxu0 %v49
    %173 = vmatprep.subr.mxu0 0.0
    %174 = vmatpush1.xpose.msra.mxu0 %v50
    %175 = vmatprep.subr.mxu0 0.0
    %176 = vmatpush1.xpose.msra.mxu0 %v51
    %177 = vmatprep.subr.mxu0 0.0
    %178 = vmatpush1.xpose.msra.mxu0 %v52
    %179 = vmatprep.subr.mxu0 0.0
    %180 = vmatpush1.xpose.msra.mxu0 %v53
    %181 = vmatprep.subr.mxu0 0.0
    %182 = vmatpush1.xpose.msra.mxu0 0.0
    %183 = vmatprep.subr.mxu0 0.0
    %184 = vmatpush1.xpose.msra.mxu0 0.0
    %185 = vmatprep.subr.mxu0 0.0
    %186 = vmatpush1.xpose.msra.mxu0 0.0
    %187 = vmatprep.subr.mxu0 0.0
    %188 = vmatpush1.xpose.msra.mxu0 0.0
    %189 = vmatprep.subr.mxu0 0.0
    %190 = vmatpush1.xpose.msra.mxu0 0.0
    %191 = vmatprep.subr.mxu0 0.0
    %192 = vmatpush1.xpose.msra.mxu0 0.0
    %193 = vmatprep.subr.mxu0 0.0
    %194 = vmatpush1.xpose.msra.mxu0 0.0
    %195 = vmatprep.subr.mxu0 0.0
    %196 = vmatpush1.xpose.msra.mxu0 0.0
    %197 = vmatprep.subr.mxu0 0.0
    %198 = vmatpush1.xpose.msra.mxu0 0.0
    %199 = vmatprep.subr.mxu0 0.0
    %200 = vmatpush1.xpose.msra.mxu0 0.0
    %201 = vmatprep.subr.mxu0 0.0
    %202 = vmatpush1.xpose.msra.mxu0 0.0
    %203 = vmatprep.subr.mxu0 0.0
    %204 = vmatpush1.xpose.msra.mxu0 0.0
    %205 = vmatprep.subr.mxu0 0.0
    %206 = vmatpush1.xpose.msra.mxu0 0.0
    %207 = vmatprep.subr.mxu0 0.0
    %208 = vmatpush1.xpose.msra.mxu0 0.0
    %209 = vmatprep.subr.mxu0 0.0
    %210 = vmatpush1.xpose.msra.mxu0 0.0
    %211 = vmatprep.subr.mxu0 0.0
    %212 = vmatpush1.xpose.msra.mxu0 0.0
    %213 = vmatprep.mubr.f32.mxu0 0.0
    %214 = vmatmul.mubr.f32.gmra.mrb[0].mxu0 %v29
    %v215 = vpop.f32.mrb[0].mxu0
    %v216 = vadd.f32 %v148, %v215
    %v217 = vpop.f32.mrb[0].mxu0
    %218 = vdwg.mxu0
    %v219 = vadd.f32 %v140, %v216
    %220 = vst [vmem:[#allocation2] sm:$0xff] %v219
    // Predicated region
    $region30: #{noisy_linear_forward.1} parent=1 // pred_check
      %p221 = pneg %p24
    $region31: #{noisy_linear_forward.1} parent=1 // pred_check_branch
      %223 = sbr.rel (%p221) target = $region33
    $region32: #{noisy_linear_forward.1} parent=1 // pred_region
      %v224 = vld [vmem:[#allocation2] sm:$0xff]
      %v225 = vld [vmem:[%s5] sm:$0x1]
      %v227 = vlaneseq
      %v228 = vshrl.u32 %v227, 7
      %v229 = vsub.s32 0, %v228
      %v230 = vrot.slane %v225, %v229
      %v232 = vadd.f32 %v224, %v230
      %233 = vst [vmem:[#allocation3] sm:$0xff] %v232
    $region33: #{noisy_linear_forward.1} parent=1 // pred_fallthru
      _
    // Predicated region
    $region34: #{noisy_linear_forward.1} parent=1 // pred_check
      _
    $region35: #{noisy_linear_forward.1} parent=1 // pred_check_branch
      %235 = sbr.rel (0) target = $region37
    $region36: #{noisy_linear_forward.1} parent=1 // pred_region
      %s237 = ssub.s32 128, 128
      %238 = vsyncadd [#allocation4], %s237
      %s240 = sshll.u32 [#allocation3], 4
      %s241 = int_to_ptr.vmem [resolvable:$true] %s240
      %243 = dma.vmem_to_hbm [thread:$0]  %s241, 128, %s6, [#allocation4]
    $region37: #{noisy_linear_forward.1} parent=1 // pred_fallthru
      _
    // Predicated region
    $region38: #{noisy_linear_forward.1} parent=1 // pred_check
      _
    $region39: #{noisy_linear_forward.1} parent=1 // pred_check_branch
      %245 = sbr.rel (0) target = $region41
    $region40: #{noisy_linear_forward.1} parent=1 // pred_region
      %246 = dma.done [#allocation4], 128
    $region41: #{noisy_linear_forward.1} parent=1 // pred_fallthru
      _
    %247 = vsyncpa [#allocation4], 1

</llo_original>
